<compile_context>
chip_gen: v7x
topology: tpu7x:2x2x1
jax: 0.10.0
libtpu: 0.0.40
codegen_flags: <defaults>
</compile_context>

<pallas_src>
import jax
import jax.numpy as jnp
import numpy as np
from jax.experimental import pallas as pl
from jax.experimental.pallas import tpu as pltpu


# ---------------------------------------------------------------------------
# Kernel: one batch tile through the whole 3-layer MLP, entirely in VMEM.
# Activations are (features, tile_b): batch on the lane axis (lane-dense).
# ---------------------------------------------------------------------------
def _mlp_q_kernel(obs_ref, act_ref,
                  w1o_ref, w1a_ref, b1_ref,
                  w2_ref, b2_ref,
                  w3_ref, b3_ref,
                  out_ref):
    # Per-tile cast to bf16 (inputs arrive in their native dtype).
    obs = obs_ref[...].astype(jnp.bfloat16)          # (tile_b, obs_dim)
    act = act_ref[...].astype(jnp.bfloat16)          # (tile_b, act_dim)

    # Layer 1: (H1, tile_b) = W1_obs(H1,Do) . obs^T + W1_act(H1,Da) . act^T
    h = jax.lax.dot_general(
        w1o_ref[...], obs,
        dimension_numbers=(((1,), (1,)), ((), ())),
        preferred_element_type=jnp.float32)
    h = h + jax.lax.dot_general(
        w1a_ref[...], act,
        dimension_numbers=(((1,), (1,)), ((), ())),
        preferred_element_type=jnp.float32)
    h = jnp.maximum(h + b1_ref[...], 0.0)             # f32 bias/ReLU, lane-dense

    # Layer 2: (H2, tile_b) = W2(H2,H1) @ h(H1,tile_b)
    h = jnp.dot(w2_ref[...], h.astype(w2_ref.dtype),
                preferred_element_type=jnp.float32)
    h = jnp.maximum(h + b2_ref[...], 0.0)

    # Output layer: (1, tile_b) = W3(1,H2) @ h(H2,tile_b); batch stays on lanes.
    q = jnp.dot(w3_ref[...], h.astype(w3_ref.dtype),
                preferred_element_type=jnp.float32)
    out_ref[...] = q + b3_ref[0, 0]                    # b3 scalar from SMEM


# ---------------------------------------------------------------------------
# Wrapper
# ---------------------------------------------------------------------------
def _round_up(x, m):
    return ((x + m - 1) // m) * m


def mlp_q_estimator(obs, act, params, *, max_tile_b=2048):
    """Pallas-backed forward of MLPQEstimator.

    obs: (B, obs_dim), act: (B, act_dim)  (any float dtype; cast in-kernel)
    params: dict from init_params()[0] (bf16 weights, f32 biases)
    returns: (B,) f32 Q values.
    """
    B, obs_dim = obs.shape
    act_dim = act.shape[1]
    h1 = params["w1_obs"].shape[0]
    h2 = params["w2"].shape[0]
    in_dim = obs_dim + act_dim

    # Batch tile selection:
    #  * small B: single full-array block.
    #  * large B: 128-aligned tile, capped so num_tiles >= 2 (lets v7x shard
    #    the parallel batch axis across both TensorCores).
    max_tile_b = max(128, (max_tile_b // 128) * 128)
    if B <= 128:
        tile_b = B
        num_tiles = 1
    else:
        tile_b = min(max_tile_b, _round_up(pl.cdiv(B, 2), 128))
        num_tiles = pl.cdiv(B, tile_b)

    # Advisory cost hint for XLA scheduling around the custom call.
    weight_bytes = sum(int(np.prod(v.shape)) * v.dtype.itemsize
                       for v in params.values())
    cost = pl.CostEstimate(
        flops=int(2 * B * (in_dim * h1 + h1 * h2 + h2)),
        transcendentals=0,
        bytes_accessed=int(B * (obs_dim * obs.dtype.itemsize
                                + act_dim * act.dtype.itemsize + 4)
                           + weight_bytes),
    )

    out = pl.pallas_call(
        _mlp_q_kernel,
        out_shape=jax.ShapeDtypeStruct((num_tiles, 1, tile_b), jnp.float32),
        grid=(num_tiles,),
        in_specs=[
            # Batch-tiled activations (double-buffered by the pipeline),
            # native dtype (no wrapper cast pass).
            pl.BlockSpec((tile_b, obs_dim), lambda i: (i, 0)),   # obs tile
            pl.BlockSpec((tile_b, act_dim), lambda i: (i, 0)),   # act tile
            # Weights / biases: constant index -> DMA'd once, VMEM-resident.
            pl.BlockSpec((h1, obs_dim), lambda i: (0, 0)),       # W1_obs (bf16)
            pl.BlockSpec((h1, act_dim), lambda i: (0, 0)),       # W1_act (bf16)
            pl.BlockSpec((h1, 1), lambda i: (0, 0)),             # b1 (f32)
            pl.BlockSpec((h2, h1), lambda i: (0, 0)),            # W2 (bf16)
            pl.BlockSpec((h2, 1), lambda i: (0, 0)),             # b2 (f32)
            pl.BlockSpec((1, h2), lambda i: (0, 0)),             # W3 (bf16)
            pl.BlockSpec(memory_space=pltpu.MemorySpace.SMEM),   # b3 (1,1) scalar
        ],
        # Lane-dense output: (num_tiles, 1, tile_b), batch on the lane axis.
        out_specs=pl.BlockSpec((None, 1, tile_b), lambda i: (i, 0, 0)),
        compiler_params=pltpu.CompilerParams(
            dimension_semantics=("parallel",),       # shard batch tiles on v7x's 2 TCs
            vmem_limit_bytes=32 * 1024 * 1024,       # confirmed ample on all gens
        ),
        cost_estimate=cost,
    )(
        obs, act,
        params["w1_obs"], params["w1_act"], params["b1"],
        params["w2"], params["b2"],
        params["w3"], params["b3"],
    )
    # Glue: flatten (num_tiles, 1, tile_b) -> (num_tiles*tile_b,) and drop the
    # padded tail rows (their values are unspecified and discarded here).
    return out.reshape(-1)[:B]


# ---------------------------------------------------------------------------
# Deterministic parameter init (PyTorch nn.Linear-style uniform bounds).
# Weights kept in PyTorch (out, in) layout; biases as (out, 1) columns.
# Returns (kernel_params, f32_reference_params).
# ---------------------------------------------------------------------------
def init_params(key, obs_dim, act_dim, hidden_sizes):
    in_dim = obs_dim + act_dim
    sizes = [in_dim] + list(hidden_sizes) + [1]
    ws, bs = [], []
    for i in range(len(sizes) - 1):
        fan_in, fan_out = sizes[i], sizes[i + 1]
        bound = 1.0 / np.sqrt(fan_in)
        key, kw, kb = jax.random.split(key, 3)
        ws.append(jax.random.uniform(kw, (fan_out, fan_in), jnp.float32,
                                     minval=-bound, maxval=bound))    # (out, in)
        bs.append(jax.random.uniform(kb, (fan_out,), jnp.float32,
                                     minval=-bound, maxval=bound))
    w1, w2, w3 = ws
    b1, b2, b3 = bs

    kernel_params = {
        "w1_obs": w1[:, :obs_dim].astype(jnp.bfloat16),   # (H1, obs_dim)
        "w1_act": w1[:, obs_dim:].astype(jnp.bfloat16),   # (H1, act_dim)
        "b1": b1.reshape(-1, 1),                          # (H1, 1) f32
        "w2": w2.astype(jnp.bfloat16),                    # (H2, H1)
        "b2": b2.reshape(-1, 1),                          # (H2, 1) f32
        "w3": w3.astype(jnp.bfloat16),                    # (1, H2)
        "b3": b3.reshape(1, 1),                           # (1, 1) f32 -> SMEM
    }
    f32_params = {"w1": w1, "b1": b1, "w2": w2, "b2": b2, "w3": w3, "b3": b3}
    return kernel_params, f32_params


# ---------------------------------------------------------------------------
# References
# ---------------------------------------------------------------------------
def reference_forward(obs, act, p):
    """Plain-JAX reference mirroring the kernel's precision (bf16 in, f32 acc)."""
    f32 = jnp.float32
    bf16 = jnp.bfloat16
    obs_b = obs.astype(bf16)
    act_b = act.astype(bf16)
    h = (jax.lax.dot_general(p["w1_obs"], obs_b, (((1,), (1,)), ((), ())),
                             preferred_element_type=f32)
         + jax.lax.dot_general(p["w1_act"], act_b, (((1,), (1,)), ((), ())),
                               preferred_element_type=f32))
    h = jnp.maximum(h + p["b1"], 0.0)
    h = jnp.dot(p["w2"], h.astype(bf16), preferred_element_type=f32)
    h = jnp.maximum(h + p["b2"], 0.0)
    q = jnp.dot(p["w3"], h.astype(bf16), preferred_element_type=f32)
    return (q + p["b3"][0, 0])[0]                      # (B,)


def reference_forward_f32(obs, act, p):
    """Pure-f32 reference matching the original PyTorch module exactly."""
    x = jnp.concatenate([obs.astype(jnp.float32), act.astype(jnp.float32)], axis=-1)
    h = jnp.maximum(x @ p["w1"].T + p["b1"], 0.0)
    h = jnp.maximum(h @ p["w2"].T + p["b2"], 0.0)
    q = h @ p["w3"].T + p["b3"]
    return jnp.squeeze(q, axis=-1)


if __name__ == "__main__":
    # Small, module-consistent shapes.  Kernel assumes two hidden layers.
    obs_dim, act_dim = 12, 4
    hidden_sizes = [32, 32]          # activation = ReLU

    key = jax.random.PRNGKey(0)
    key, k_par = jax.random.split(key)
    params, params_f32 = init_params(k_par, obs_dim, act_dim, hidden_sizes)

    # --- Test 1: tiny batch, f32 inputs (exercise in-kernel bf16 cast). -----
    key, k1, k2 = jax.random.split(key, 3)
    obs = jax.random.normal(k1, (8, obs_dim), jnp.float32)
    act = jax.random.normal(k2, (8, act_dim), jnp.float32)

    q = jax.block_until_ready(mlp_q_estimator(obs, act, params))
    assert q.shape == (8,)
    q_ref = reference_forward(obs, act, params)
    np.testing.assert_allclose(np.asarray(q), np.asarray(q_ref),
                               rtol=2e-3, atol=2e-3)
    # Loose check against exact-f32 PyTorch semantics (bf16 rounding only).
    q_ref32 = reference_forward_f32(obs, act, params_f32)
    np.testing.assert_allclose(np.asarray(q), np.asarray(q_ref32),
                               rtol=5e-2, atol=5e-2)

    # --- Test 2: multi-tile batch (>=2 grid steps, tail padding, bf16 in). ---
    key, k3, k4 = jax.random.split(key, 3)
    obs2 = jax.random.normal(k3, (260, obs_dim), jnp.bfloat16)
    act2 = jax.random.normal(k4, (260, act_dim), jnp.bfloat16)

    q2 = jax.block_until_ready(mlp_q_estimator(obs2, act2, params))
    assert q2.shape == (260,)
    q2_ref = reference_forward(obs2, act2, params)
    np.testing.assert_allclose(np.asarray(q2), np.asarray(q2_ref),
                               rtol=2e-3, atol=2e-3)

    print("KERNEL_OK")
</pallas_src>

<mosaic_0001>
module attributes {stable_mosaic.version = 11 : i64} {
  func.func @_mlp_q_kernel(%arg0: i32, %arg1: memref<8x12xf32, #tpu.memory_space<vmem>>, %arg2: memref<8x4xf32, #tpu.memory_space<vmem>>, %arg3: memref<32x12xbf16, #tpu.memory_space<vmem>>, %arg4: memref<32x4xbf16, #tpu.memory_space<vmem>>, %arg5: memref<32x1xf32, #tpu.memory_space<vmem>>, %arg6: memref<32x32xbf16, #tpu.memory_space<vmem>>, %arg7: memref<32x1xf32, #tpu.memory_space<vmem>>, %arg8: memref<1x32xbf16, #tpu.memory_space<vmem>>, %arg9: memref<1x1xf32, #tpu.memory_space<smem>>, %arg10: memref<1x1x8xf32, #tpu.memory_space<vmem>>) attributes {dimension_semantics = [#tpu.dimension_semantics<parallel>], iteration_bounds = array<i64: 1>, scalar_prefetch = 0 : i64, scratch_operands = 0 : i64, tpu.core_type = #tpu.core_type<tc>, window_params = [{transform_indices = @transform_0, window_bounds = array<i64: 8, 12>}, {transform_indices = @transform_1, window_bounds = array<i64: 8, 4>}, {pipeline_mode = #tpu.pipeline_mode<synchronous>, transform_indices = @transform_2, window_bounds = array<i64: 32, 12>}, {pipeline_mode = #tpu.pipeline_mode<synchronous>, transform_indices = @transform_3, window_bounds = array<i64: 32, 4>}, {pipeline_mode = #tpu.pipeline_mode<synchronous>, transform_indices = @transform_4, window_bounds = array<i64: 32, 1>}, {pipeline_mode = #tpu.pipeline_mode<synchronous>, transform_indices = @transform_5, window_bounds = array<i64: 32, 32>}, {pipeline_mode = #tpu.pipeline_mode<synchronous>, transform_indices = @transform_6, window_bounds = array<i64: 32, 1>}, {pipeline_mode = #tpu.pipeline_mode<synchronous>, transform_indices = @transform_7, window_bounds = array<i64: 1, 32>}, {transform_indices = @transform_8, window_bounds = array<i64: 1, 1>}, {transform_indices = @transform_9, window_bounds = array<i64: 1, 1, 8>}]} {
    %c0 = arith.constant 0 : index
    %c0_0 = arith.constant 0 : index
    %0 = vector.load %arg1[%c0, %c0_0] : memref<8x12xf32, #tpu.memory_space<vmem>>, vector<8x12xf32>
    %1 = arith.truncf %0 : vector<8x12xf32> to vector<8x12xbf16>
    %c0_1 = arith.constant 0 : index
    %c0_2 = arith.constant 0 : index
    %2 = vector.load %arg2[%c0_1, %c0_2] : memref<8x4xf32, #tpu.memory_space<vmem>>, vector<8x4xf32>
    %3 = arith.truncf %2 : vector<8x4xf32> to vector<8x4xbf16>
    %c0_3 = arith.constant 0 : index
    %c0_4 = arith.constant 0 : index
    %4 = vector.load %arg3[%c0_3, %c0_4] : memref<32x12xbf16, #tpu.memory_space<vmem>>, vector<32x12xbf16>
    %cst = arith.constant dense<0.000000e+00> : vector<32x8xf32>
    %5 = tpu.matmul %4, %1, %cst {dimension_numbers = #tpu.dot_dimension_numbers<[1], [1], [0], [0], [0, 0, 1, 0], [], []>} : vector<32x12xbf16>, vector<8x12xbf16>, vector<32x8xf32> -> vector<32x8xf32>
    %c0_5 = arith.constant 0 : index
    %c0_6 = arith.constant 0 : index
    %6 = vector.load %arg4[%c0_5, %c0_6] : memref<32x4xbf16, #tpu.memory_space<vmem>>, vector<32x4xbf16>
    %cst_7 = arith.constant dense<0.000000e+00> : vector<32x8xf32>
    %7 = tpu.matmul %6, %3, %cst_7 {dimension_numbers = #tpu.dot_dimension_numbers<[1], [1], [0], [0], [0, 0, 1, 0], [], []>} : vector<32x4xbf16>, vector<8x4xbf16>, vector<32x8xf32> -> vector<32x8xf32>
    %8 = arith.addf %5, %7 : vector<32x8xf32>
    %c0_8 = arith.constant 0 : index
    %c0_9 = arith.constant 0 : index
    %9 = vector.load %arg5[%c0_8, %c0_9] : memref<32x1xf32, #tpu.memory_space<vmem>>, vector<32x1xf32>
    %10 = vector.broadcast %9 : vector<32x1xf32> to vector<32x8xf32>
    %11 = arith.addf %8, %10 : vector<32x8xf32>
    %cst_10 = arith.constant 0.000000e+00 : f32
    %12 = vector.broadcast %cst_10 : f32 to vector<32x8xf32>
    %13 = arith.maximumf %11, %12 : vector<32x8xf32>
    %c0_11 = arith.constant 0 : index
    %c0_12 = arith.constant 0 : index
    %14 = vector.load %arg6[%c0_11, %c0_12] : memref<32x32xbf16, #tpu.memory_space<vmem>>, vector<32x32xbf16>
    %15 = arith.truncf %13 : vector<32x8xf32> to vector<32x8xbf16>
    %cst_13 = arith.constant dense<0.000000e+00> : vector<32x8xf32>
    %16 = tpu.matmul %14, %15, %cst_13 {dimension_numbers = #tpu.dot_dimension_numbers<[1], [0], [0], [1], [0, 0, 1, 1], [], []>} : vector<32x32xbf16>, vector<32x8xbf16>, vector<32x8xf32> -> vector<32x8xf32>
    %c0_14 = arith.constant 0 : index
    %c0_15 = arith.constant 0 : index
    %17 = vector.load %arg7[%c0_14, %c0_15] : memref<32x1xf32, #tpu.memory_space<vmem>>, vector<32x1xf32>
    %18 = vector.broadcast %17 : vector<32x1xf32> to vector<32x8xf32>
    %19 = arith.addf %16, %18 : vector<32x8xf32>
    %cst_16 = arith.constant 0.000000e+00 : f32
    %20 = vector.broadcast %cst_16 : f32 to vector<32x8xf32>
    %21 = arith.maximumf %19, %20 : vector<32x8xf32>
    %c0_17 = arith.constant 0 : index
    %c0_18 = arith.constant 0 : index
    %22 = vector.load %arg8[%c0_17, %c0_18] : memref<1x32xbf16, #tpu.memory_space<vmem>>, vector<1x32xbf16>
    %23 = arith.truncf %21 : vector<32x8xf32> to vector<32x8xbf16>
    %cst_19 = arith.constant dense<0.000000e+00> : vector<1x8xf32>
    %24 = tpu.matmul %22, %23, %cst_19 {dimension_numbers = #tpu.dot_dimension_numbers<[1], [0], [0], [1], [0, 0, 1, 1], [], []>} : vector<1x32xbf16>, vector<32x8xbf16>, vector<1x8xf32> -> vector<1x8xf32>
    %c0_20 = arith.constant 0 : index
    %c0_21 = arith.constant 0 : index
    %25 = memref.load %arg9[%c0_20, %c0_21] : memref<1x1xf32, #tpu.memory_space<smem>>
    %26 = vector.broadcast %25 : f32 to vector<1x8xf32>
    %27 = arith.addf %24, %26 : vector<1x8xf32>
    %c0_22 = arith.constant 0 : index
    %c0_23 = arith.constant 0 : index
    %c0_24 = arith.constant 0 : index
    %28 = vector.load %arg10[%c0_22, %c0_23, %c0_24] : memref<1x1x8xf32, #tpu.memory_space<vmem>>, vector<1x1x8xf32>
    %29 = vector.shape_cast %28 : vector<1x1x8xf32> to vector<1x8xf32>
    %30 = vector.shape_cast %27 : vector<1x8xf32> to vector<1x1x8xf32>
    tpu.vector_store %arg10[%c0_22, %c0_23, %c0_24], %30 {strides = array<i32>} : memref<1x1x8xf32, #tpu.memory_space<vmem>>, vector<1x1x8xf32>,
    return
  }
  func.func @transform_0(%arg0: i32) -> (i32, i32) {
    %c0_i32 = arith.constant 0 : i32
    %c0_i32_0 = arith.constant 0 : i32
    return %arg0, %c0_i32 : i32, i32
  }
  func.func @transform_1(%arg0: i32) -> (i32, i32) {
    %c0_i32 = arith.constant 0 : i32
    %c0_i32_0 = arith.constant 0 : i32
    return %arg0, %c0_i32 : i32, i32
  }
  func.func @transform_2(%arg0: i32) -> (i32, i32) {
    %c0_i32 = arith.constant 0 : i32
    %c0_i32_0 = arith.constant 0 : i32
    %c0_i32_1 = arith.constant 0 : i32
    return %c0_i32, %c0_i32_0 : i32, i32
  }
  func.func @transform_3(%arg0: i32) -> (i32, i32) {
    %c0_i32 = arith.constant 0 : i32
    %c0_i32_0 = arith.constant 0 : i32
    %c0_i32_1 = arith.constant 0 : i32
    return %c0_i32, %c0_i32_0 : i32, i32
  }
  func.func @transform_4(%arg0: i32) -> (i32, i32) {
    %c0_i32 = arith.constant 0 : i32
    %c0_i32_0 = arith.constant 0 : i32
    %c0_i32_1 = arith.constant 0 : i32
    return %c0_i32, %c0_i32_0 : i32, i32
  }
  func.func @transform_5(%arg0: i32) -> (i32, i32) {
    %c0_i32 = arith.constant 0 : i32
    %c0_i32_0 = arith.constant 0 : i32
    %c0_i32_1 = arith.constant 0 : i32
    return %c0_i32, %c0_i32_0 : i32, i32
  }
  func.func @transform_6(%arg0: i32) -> (i32, i32) {
    %c0_i32 = arith.constant 0 : i32
    %c0_i32_0 = arith.constant 0 : i32
    %c0_i32_1 = arith.constant 0 : i32
    return %c0_i32, %c0_i32_0 : i32, i32
  }
  func.func @transform_7(%arg0: i32) -> (i32, i32) {
    %c0_i32 = arith.constant 0 : i32
    %c0_i32_0 = arith.constant 0 : i32
    %c0_i32_1 = arith.constant 0 : i32
    return %c0_i32, %c0_i32_0 : i32, i32
  }
  func.func @transform_8(%arg0: i32) -> (i32, i32) {
    %c0_i32 = arith.constant 0 : i32
    %c0_i32_0 = arith.constant 0 : i32
    %c0_i32_1 = arith.constant 0 : i32
    return %c0_i32, %c0_i32_0 : i32, i32
  }
  func.func @transform_9(%arg0: i32) -> (i32, i32, i32) {
    %c0_i32 = arith.constant 0 : i32
    %c0_i32_0 = arith.constant 0 : i32
    %c0_i32_1 = arith.constant 0 : i32
    return %arg0, %c0_i32, %c0_i32_0 : i32, i32, i32
  }
}

</mosaic_0001>

<llo_original>
// kernel: tpu_custom_call.1
$region0: #{tpu_custom_call.1}
  #allocation0 [shape = 'u32[]', space=smem, size = 0x4, offset = 0x4, fixed_abs, tag = 'smem constant byte address 0x4 - core index']
  #allocation1 [shape = 'u32[144,128]{1,0:T(1,128)}', space=vmem, size = 0x12000, scoped, tag = 'internal scratch']
  #allocation2 [shape = 'f32[1,1]{1,0:T(1,128)S(6)}', space=smem, size = 0x200, scoped, tag = 'scoped memory for tpu_custom_call.1']
  %s0 = inlined_call_operand.vmem [shape: f32[8,12], index: 0, kind: input, shape index: {}]
  %s1 = inlined_call_operand.vmem [shape: f32[8,4], index: 1, kind: input, shape index: {}]
  %s2 = inlined_call_operand.vmem [shape: bf16[32,12], index: 2, kind: input, shape index: {}]
  %s3 = inlined_call_operand.vmem [shape: bf16[32,4], index: 3, kind: input, shape index: {}]
  %s4 = inlined_call_operand.vmem [shape: f32[32,1], index: 4, kind: input, shape index: {}]
  %s5 = inlined_call_operand.vmem [shape: bf16[32,32], index: 5, kind: input, shape index: {}]
  %s6 = inlined_call_operand.vmem [shape: f32[32,1], index: 6, kind: input, shape index: {}]
  %s7 = inlined_call_operand.vmem [shape: bf16[1,32], index: 7, kind: input, shape index: {}]
  %s8 = inlined_call_operand.<no memory space> [shape: f32[1,1], index: 8, kind: input, shape index: {}]
  %s9 = inlined_call_operand.hbm [shape: f32[1,1,8], index: 9, kind: output, shape index: {}]
  %s10 = sld [smem:[#allocation0]]
  $region46: #{tpu_custom_call.1} parent=0
    _
  %s12 = ssub.s32 1, %s10
  %s13 = scalar_select 0, %s12, %s10
  %14 = sst [smem:[#allocation2]] %s8
  $region1: #{tpu_custom_call.1} parent=0
    #allocation3 [shape = 'u8[512]{0}', space=vmem, size = 0x400, scoped, tag = 'output window, operand 0, single buffered']
    #allocation4 [shape = 's32[1]{0}', space=sflag, size = 0x4, scoped, tag = 'scoped memory for tpu_custom_call.1']
    %15 = vsyncpa [#allocation4], 0
    // Predicated region
    $region2: #{tpu_custom_call.1} parent=1 // pred_check
      _
    $region3: #{tpu_custom_call.1} parent=1 // pred_check_branch
      %17 = sbr.rel (0) target = $region5
    $region4: #{tpu_custom_call.1} parent=1 // pred_region
      _
    $region5: #{tpu_custom_call.1} parent=1 // pred_fallthru
      _
    // Predicated region
    $region6: #{tpu_custom_call.1} parent=1 // pred_check
      _
    $region7: #{tpu_custom_call.1} parent=1 // pred_check_branch
      %19 = sbr.rel (0) target = $region9
    $region8: #{tpu_custom_call.1} parent=1 // pred_region
      _
    $region9: #{tpu_custom_call.1} parent=1 // pred_fallthru
      _
    // Predicated region
    $region10: #{tpu_custom_call.1} parent=1 // pred_check
      _
    $region11: #{tpu_custom_call.1} parent=1 // pred_check_branch
      %21 = sbr.rel (0) target = $region13
    $region12: #{tpu_custom_call.1} parent=1 // pred_region
      _
    $region13: #{tpu_custom_call.1} parent=1 // pred_fallthru
      _
    // Predicated region
    $region14: #{tpu_custom_call.1} parent=1 // pred_check
      _
    $region15: #{tpu_custom_call.1} parent=1 // pred_check_branch
      %23 = sbr.rel (0) target = $region17
    $region16: #{tpu_custom_call.1} parent=1 // pred_region
      _
    $region17: #{tpu_custom_call.1} parent=1 // pred_fallthru
      _
    // Predicated region
    $region18: #{tpu_custom_call.1} parent=1 // pred_check
      _
    $region19: #{tpu_custom_call.1} parent=1 // pred_check_branch
      %25 = sbr.rel (0) target = $region21
    $region20: #{tpu_custom_call.1} parent=1 // pred_region
      _
    $region21: #{tpu_custom_call.1} parent=1 // pred_fallthru
      _
    // Predicated region
    $region22: #{tpu_custom_call.1} parent=1 // pred_check
      _
    $region23: #{tpu_custom_call.1} parent=1 // pred_check_branch
      %27 = sbr.rel (0) target = $region25
    $region24: #{tpu_custom_call.1} parent=1 // pred_region
      _
    $region25: #{tpu_custom_call.1} parent=1 // pred_fallthru
      _
    // Predicated region
    $region26: #{tpu_custom_call.1} parent=1 // pred_check
      _
    $region27: #{tpu_custom_call.1} parent=1 // pred_check_branch
      %29 = sbr.rel (0) target = $region29
    $region28: #{tpu_custom_call.1} parent=1 // pred_region
      _
    $region29: #{tpu_custom_call.1} parent=1 // pred_fallthru
      _
    // Predicated region
    $region30: #{tpu_custom_call.1} parent=1 // pred_check
      _
    $region31: #{tpu_custom_call.1} parent=1 // pred_check_branch
      %31 = sbr.rel (0) target = $region33
    $region32: #{tpu_custom_call.1} parent=1 // pred_region
      _
    $region33: #{tpu_custom_call.1} parent=1 // pred_fallthru
      _
    // Predicated region
    $region34: #{tpu_custom_call.1} parent=1 // pred_check
      _
    $region35: #{tpu_custom_call.1} parent=1 // pred_check_branch
      %33 = sbr.rel (0) target = $region37
    $region36: #{tpu_custom_call.1} parent=1 // pred_region
      _
    $region37: #{tpu_custom_call.1} parent=1 // pred_fallthru
      _
    %v35 = vld [vmem:[%s0] sm:$0xff]
    %v36 = vpack.c.bf16 %v35, %v35
    %v37 = vld [vmem:[%s1] sm:$0xff]
    %v38 = vpack.c.bf16 %v37, %v37
    %v39 = vld [vmem:[%s2] sm:$0xf]
    %v40 = vld [vmem:[%s2 + $0x4] sm:$0xf]
    %v41 = vld [vmem:[%s2 + $0x8] sm:$0xf]
    %v42 = vld [vmem:[%s2 + $0xc] sm:$0xf]
    %v43 = vld [vmem:[%s3] sm:$0xf]
    %v44 = vld [vmem:[%s3 + $0x4] sm:$0xf]
    %v45 = vld [vmem:[%s3 + $0x8] sm:$0xf]
    %v46 = vld [vmem:[%s3 + $0xc] sm:$0xf]
    %v51 = vunpack.c.l.b16 %v43
    %v52 = vunpack.c.l.b16 %v44
    %v53 = vunpack.c.l.b16 %v45
    %v54 = vunpack.c.l.b16 %v46
    %v55 = vpack.c.b16 %v52, %v51
    %v56 = vpack.c.b16 %v54, %v53
    %vm57 = vcmask 31744
    %v59 = vsel %vm57, %v55, 0
    %v62 = vsel %vm57, %v56, 0
    %v65 = vsel %vm57, %v38, 0
    %67 = vmatprep.subr.bf16.mxu0 0
    %68 = vmatpush1.bf16.xpose.msra.mxu0 %v65
    %69 = vmatprep.subr.bf16.mxu0 0
    %70 = vmatpush1.bf16.xpose.msra.mxu0 0
    %71 = vmatprep.subr.bf16.mxu0 0
    %72 = vmatpush1.bf16.xpose.msra.mxu0 0
    %73 = vmatprep.subr.bf16.mxu0 0
    %74 = vmatpush1.bf16.xpose.msra.mxu0 0
    %75 = vmatprep.subr.bf16.mxu0 0
    %76 = vmatpush1.bf16.xpose.msra.mxu0 0
    %77 = vmatprep.subr.bf16.mxu0 0
    %78 = vmatpush1.bf16.xpose.msra.mxu0 0
    %79 = vmatprep.subr.bf16.mxu0 0
    %80 = vmatpush1.bf16.xpose.msra.mxu0 0
    %81 = vmatprep.subr.bf16.mxu0 0
    %82 = vmatpush1.bf16.xpose.msra.mxu0 0
    %83 = vmatprep.subr.bf16.mxu0 0
    %84 = vmatpush1.bf16.xpose.msra.mxu0 0
    %85 = vmatprep.subr.bf16.mxu0 0
    %86 = vmatpush1.bf16.xpose.msra.mxu0 0
    %87 = vmatprep.subr.bf16.mxu0 0
    %88 = vmatpush1.bf16.xpose.msra.mxu0 0
    %89 = vmatprep.subr.bf16.mxu0 0
    %90 = vmatpush1.bf16.xpose.msra.mxu0 0
    %91 = vmatprep.subr.bf16.mxu0 0
    %92 = vmatpush1.bf16.xpose.msra.mxu0 0
    %93 = vmatprep.subr.bf16.mxu0 0
    %94 = vmatpush1.bf16.xpose.msra.mxu0 0
    %95 = vmatprep.subr.bf16.mxu0 0
    %96 = vmatpush1.bf16.xpose.msra.mxu0 0
    %97 = vmatprep.subr.bf16.mxu0 0
    %98 = vmatpush1.bf16.xpose.msra.mxu0 0
    %99 = vmatprep.mubr.bf16.mxu0 0
    %100 = vmatmul.mubr.bf16.gmra.mrb[0].mxu0 %v59
    %v101 = vpop.f32.mrb[0].mxu0
    %v102 = vadd.f32 0.0, %v101
    %v103 = vpop.f32.mrb[0].mxu0
    %v104 = vpop.f32.mrb[0].mxu0
    %v105 = vadd.f32 0.0, %v104
    %v106 = vpop.f32.mrb[0].mxu0
    %107 = vmatprep.mubr.bf16.mxu0 0
    %108 = vmatmul.mubr.bf16.gmra.mrb[0].mxu0 %v62
    %v109 = vpop.f32.mrb[0].mxu0
    %v110 = vadd.f32 0.0, %v109
    %v111 = vpop.f32.mrb[0].mxu0
    %v112 = vpop.f32.mrb[0].mxu0
    %v113 = vadd.f32 0.0, %v112
    %v114 = vpop.f32.mrb[0].mxu0
    %115 = vdwg.mxu0
    %v120 = vunpack.c.l.b16 %v39
    %v121 = vunpack.c.l.b16 %v40
    %v122 = vunpack.c.l.b16 %v41
    %v123 = vunpack.c.l.b16 %v42
    %v124 = vpack.c.b16 %v121, %v120
    %v125 = vpack.c.b16 %v123, %v122
    %vm126 = vcmask 97280
    %v128 = vsel %vm126, %v124, 0
    %v131 = vsel %vm126, %v125, 0
    %v134 = vsel %vm126, %v36, 0
    %136 = vmatprep.subr.bf16.mxu0 0
    %137 = vmatpush1.bf16.xpose.msra.mxu0 %v134
    %138 = vmatprep.subr.bf16.mxu0 0
    %139 = vmatpush1.bf16.xpose.msra.mxu0 0
    %140 = vmatprep.subr.bf16.mxu0 0
    %141 = vmatpush1.bf16.xpose.msra.mxu0 0
    %142 = vmatprep.subr.bf16.mxu0 0
    %143 = vmatpush1.bf16.xpose.msra.mxu0 0
    %144 = vmatprep.subr.bf16.mxu0 0
    %145 = vmatpush1.bf16.xpose.msra.mxu0 0
    %146 = vmatprep.subr.bf16.mxu0 0
    %147 = vmatpush1.bf16.xpose.msra.mxu0 0
    %148 = vmatprep.subr.bf16.mxu0 0
    %149 = vmatpush1.bf16.xpose.msra.mxu0 0
    %150 = vmatprep.subr.bf16.mxu0 0
    %151 = vmatpush1.bf16.xpose.msra.mxu0 0
    %152 = vmatprep.subr.bf16.mxu0 0
    %153 = vmatpush1.bf16.xpose.msra.mxu0 0
    %154 = vmatprep.subr.bf16.mxu0 0
    %155 = vmatpush1.bf16.xpose.msra.mxu0 0
    %156 = vmatprep.subr.bf16.mxu0 0
    %157 = vmatpush1.bf16.xpose.msra.mxu0 0
    %158 = vmatprep.subr.bf16.mxu0 0
    %159 = vmatpush1.bf16.xpose.msra.mxu0 0
    %160 = vmatprep.subr.bf16.mxu0 0
    %161 = vmatpush1.bf16.xpose.msra.mxu0 0
    %162 = vmatprep.subr.bf16.mxu0 0
    %163 = vmatpush1.bf16.xpose.msra.mxu0 0
    %164 = vmatprep.subr.bf16.mxu0 0
    %165 = vmatpush1.bf16.xpose.msra.mxu0 0
    %166 = vmatprep.subr.bf16.mxu0 0
    %167 = vmatpush1.bf16.xpose.msra.mxu0 0
    %168 = vmatprep.mubr.bf16.mxu0 0
    %169 = vmatmul.mubr.bf16.gmra.mrb[0].mxu0 %v128
    %v170 = vpop.f32.mrb[0].mxu0
    %v171 = vadd.f32 %v102, %v170
    %v172 = vpop.f32.mrb[0].mxu0
    %v173 = vpop.f32.mrb[0].mxu0
    %v174 = vadd.f32 %v105, %v173
    %v175 = vpop.f32.mrb[0].mxu0
    %176 = vmatprep.mubr.bf16.mxu0 0
    %177 = vmatmul.mubr.bf16.gmra.mrb[0].mxu0 %v131
    %v178 = vpop.f32.mrb[0].mxu0
    %v179 = vadd.f32 %v110, %v178
    %v180 = vpop.f32.mrb[0].mxu0
    %v181 = vpop.f32.mrb[0].mxu0
    %v182 = vadd.f32 %v113, %v181
    %v183 = vpop.f32.mrb[0].mxu0
    %184 = vdwg.mxu0
    %v185 = vld [vmem:[%s4] sm:$0xff]
    %v186 = vld [vmem:[%s4 + $0x8] sm:$0xff]
    %v187 = vld [vmem:[%s4 + $0x10] sm:$0xff]
    %v188 = vld [vmem:[%s4 + $0x18] sm:$0xff]
    %190 = vset.pattern.permute.xlu0 0
    %191 = vperm.xlu0 %190, %v185
    %v192 = vpop.permute.xlu0 %191
    %195 = vset.pattern.permute.xlu0 0
    %196 = vperm.xlu0 %195, %v186
    %v197 = vpop.permute.xlu0 %196
    %200 = vset.pattern.permute.xlu0 0
    %201 = vperm.xlu0 %200, %v187
    %v202 = vpop.permute.xlu0 %201
    %205 = vset.pattern.permute.xlu0 0
    %206 = vperm.xlu0 %205, %v188
    %v207 = vpop.permute.xlu0 %206
    %v209 = vadd.f32 %v171, %v192
    %v210 = vadd.f32 %v174, %v197
    %v211 = vadd.f32 %v179, %v202
    %v212 = vadd.f32 %v182, %v207
    %v213 = vmax.f32 %v209, 0.0
    %v214 = vmax.f32 %v210, 0.0
    %v215 = vmax.f32 %v211, 0.0
    %v216 = vmax.f32 %v212, 0.0
    %v217 = vld [vmem:[%s5] sm:$0xf]
    %v218 = vld [vmem:[%s5 + $0x4] sm:$0xf]
    %v219 = vld [vmem:[%s5 + $0x8] sm:$0xf]
    %v220 = vld [vmem:[%s5 + $0xc] sm:$0xf]
    %v221 = vpack.c.bf16 %v214, %v213
    %v222 = vpack.c.bf16 %v216, %v215
    %v223 = vld [vmem:[%s6] sm:$0xff]
    %v224 = vld [vmem:[%s6 + $0x8] sm:$0xff]
    %v225 = vld [vmem:[%s6 + $0x10] sm:$0xff]
    %v226 = vld [vmem:[%s6 + $0x18] sm:$0xff]
    %228 = vset.pattern.permute.xlu0 0
    %229 = vperm.xlu0 %228, %v223
    %v230 = vpop.permute.xlu0 %229
    %233 = vset.pattern.permute.xlu0 0
    %234 = vperm.xlu0 %233, %v224
    %v235 = vpop.permute.xlu0 %234
    %238 = vset.pattern.permute.xlu0 0
    %239 = vperm.xlu0 %238, %v225
    %v240 = vpop.permute.xlu0 %239
    %243 = vset.pattern.permute.xlu0 0
    %244 = vperm.xlu0 %243, %v226
    %v245 = vpop.permute.xlu0 %244
    %v251 = vunpack.c.l.b16 %v217
    %v252 = vunpack.c.l.b16 %v218
    %v253 = vunpack.c.l.b16 %v219
    %v254 = vunpack.c.l.b16 %v220
    %v255 = vpack.c.b16 %v252, %v251
    %v256 = vpack.c.b16 %v254, %v253
    %vm257 = vcmask 261120
    %v259 = vsel %vm257, %v255, 0
    %v262 = vsel %vm257, %v256, 0
    %264 = vmatprep.subr.bf16.mxu0 0
    %265 = vmatpush1.bf16.msra.mxu0 %v221
    %266 = vmatprep.subr.bf16.mxu0 0
    %267 = vmatpush1.bf16.msra.mxu0 %v222
    %268 = vmatprep.subr.bf16.mxu0 0
    %269 = vmatpush1.bf16.msra.mxu0 0
    %270 = vmatprep.subr.bf16.mxu0 0
    %271 = vmatpush1.bf16.msra.mxu0 0
    %272 = vmatprep.subr.bf16.mxu0 0
    %273 = vmatpush1.bf16.msra.mxu0 0
    %274 = vmatprep.subr.bf16.mxu0 0
    %275 = vmatpush1.bf16.msra.mxu0 0
    %276 = vmatprep.subr.bf16.mxu0 0
    %277 = vmatpush1.bf16.msra.mxu0 0
    %278 = vmatprep.subr.bf16.mxu0 0
    %279 = vmatpush1.bf16.msra.mxu0 0
    %280 = vmatprep.subr.bf16.mxu0 0
    %281 = vmatpush1.bf16.msra.mxu0 0
    %282 = vmatprep.subr.bf16.mxu0 0
    %283 = vmatpush1.bf16.msra.mxu0 0
    %284 = vmatprep.subr.bf16.mxu0 0
    %285 = vmatpush1.bf16.msra.mxu0 0
    %286 = vmatprep.subr.bf16.mxu0 0
    %287 = vmatpush1.bf16.msra.mxu0 0
    %288 = vmatprep.subr.bf16.mxu0 0
    %289 = vmatpush1.bf16.msra.mxu0 0
    %290 = vmatprep.subr.bf16.mxu0 0
    %291 = vmatpush1.bf16.msra.mxu0 0
    %292 = vmatprep.subr.bf16.mxu0 0
    %293 = vmatpush1.bf16.msra.mxu0 0
    %294 = vmatprep.subr.bf16.mxu0 0
    %295 = vmatpush1.bf16.msra.mxu0 0
    %296 = vmatprep.mubr.bf16.mxu0 0
    %297 = vmatmul.mubr.bf16.gmra.mrb[0].mxu0 %v259
    %v298 = vpop.f32.mrb[0].mxu0
    %v299 = vadd.f32 %v230, %v298
    %v300 = vpop.f32.mrb[0].mxu0
    %v301 = vpop.f32.mrb[0].mxu0
    %v302 = vadd.f32 %v235, %v301
    %v303 = vpop.f32.mrb[0].mxu0
    %304 = vmatprep.mubr.bf16.mxu0 0
    %305 = vmatmul.mubr.bf16.gmra.mrb[0].mxu0 %v262
    %v306 = vpop.f32.mrb[0].mxu0
    %v307 = vadd.f32 %v240, %v306
    %v308 = vpop.f32.mrb[0].mxu0
    %v309 = vpop.f32.mrb[0].mxu0
    %v310 = vadd.f32 %v245, %v309
    %v311 = vpop.f32.mrb[0].mxu0
    %312 = vdwg.mxu0
    %v313 = vmax.f32 %v299, 0.0
    %v314 = vmax.f32 %v302, 0.0
    %v315 = vmax.f32 %v307, 0.0
    %v316 = vmax.f32 %v310, 0.0
    %v317 = vld [vmem:[%s7] sm:$0x1]
    %v318 = vpack.c.bf16 %v314, %v313
    %v319 = vpack.c.bf16 %v316, %v315
    %s320 = sld [smem:[#allocation2]]
    %v321 = vstv %s320
    %v323 = vsel %vm257, %v317, 0
    %325 = vmatprep.subr.bf16.mxu0 0
    %326 = vmatpush1.bf16.msra.mxu0 %v318
    %327 = vmatprep.subr.bf16.mxu0 0
    %328 = vmatpush1.bf16.msra.mxu0 %v319
    %329 = vmatprep.subr.bf16.mxu0 0
    %330 = vmatpush1.bf16.msra.mxu0 0
    %331 = vmatprep.subr.bf16.mxu0 0
    %332 = vmatpush1.bf16.msra.mxu0 0
    %333 = vmatprep.subr.bf16.mxu0 0
    %334 = vmatpush1.bf16.msra.mxu0 0
    %335 = vmatprep.subr.bf16.mxu0 0
    %336 = vmatpush1.bf16.msra.mxu0 0
    %337 = vmatprep.subr.bf16.mxu0 0
    %338 = vmatpush1.bf16.msra.mxu0 0
    %339 = vmatprep.subr.bf16.mxu0 0
    %340 = vmatpush1.bf16.msra.mxu0 0
    %341 = vmatprep.subr.bf16.mxu0 0
    %342 = vmatpush1.bf16.msra.mxu0 0
    %343 = vmatprep.subr.bf16.mxu0 0
    %344 = vmatpush1.bf16.msra.mxu0 0
    %345 = vmatprep.subr.bf16.mxu0 0
    %346 = vmatpush1.bf16.msra.mxu0 0
    %347 = vmatprep.subr.bf16.mxu0 0
    %348 = vmatpush1.bf16.msra.mxu0 0
    %349 = vmatprep.subr.bf16.mxu0 0
    %350 = vmatpush1.bf16.msra.mxu0 0
    %351 = vmatprep.subr.bf16.mxu0 0
    %352 = vmatpush1.bf16.msra.mxu0 0
    %353 = vmatprep.subr.bf16.mxu0 0
    %354 = vmatpush1.bf16.msra.mxu0 0
    %355 = vmatprep.subr.bf16.mxu0 0
    %356 = vmatpush1.bf16.msra.mxu0 0
    %357 = vmatprep.mubr.bf16.mxu0 0
    %358 = vmatmul.mubr.bf16.gmra.mrb[0].mxu0 %v323
    %v359 = vpop.f32.mrb[0].mxu0
    %v360 = vadd.f32 %v321, %v359
    %v361 = vpop.f32.mrb[0].mxu0
    %v362 = vpop.f32.mrb[0].mxu0
    %v363 = vpop.f32.mrb[0].mxu0
    %364 = vdwg.mxu0
    %vm365 = vcmask 57344
    %366 = vst.msk [vmem:[#allocation3] sm:$0x1] %vm365, %v360
    // Predicated region
    $region38: #{tpu_custom_call.1} parent=1 // pred_check
      _
    $region39: #{tpu_custom_call.1} parent=1 // pred_check_branch
      %368 = sbr.rel (0) target = $region41
    $region40: #{tpu_custom_call.1} parent=1 // pred_region
      %s370 = ssub.s32 16, 16
      %371 = vsyncadd [#allocation4], %s370
      %s373 = sshll.u32 [#allocation3], 4
      %s374 = int_to_ptr.vmem [resolvable:$true] %s373
      %376 = dma.vmem_to_hbm [thread:$0]  %s374, 16, %s9, [#allocation4]
    $region41: #{tpu_custom_call.1} parent=1 // pred_fallthru
      _
    // Predicated region
    $region42: #{tpu_custom_call.1} parent=1 // pred_check
      _
    $region43: #{tpu_custom_call.1} parent=1 // pred_check_branch
      %378 = sbr.rel (0) target = $region45
    $region44: #{tpu_custom_call.1} parent=1 // pred_region
      %379 = dma.done [#allocation4], 16
    $region45: #{tpu_custom_call.1} parent=1 // pred_fallthru
      _
    %380 = vsyncpa [#allocation4], 1

</llo_original>
